<compile_context>
chip_gen: v5e
topology: v5e:2x2
jax: 0.10.0
libtpu: 0.0.40
codegen_flags: <defaults>
</compile_context>

<pallas_src>
import math
import jax
import jax.numpy as jnp
from jax.experimental import pallas as pl
from jax.experimental.pallas import tpu as pltpu


# ----------------------------------------------------------------------------
# Fused kernel: embedding gather -> stacked LSTM -> FC -> softmax
# ----------------------------------------------------------------------------
def make_fused_kernel(num_layers, T, N, H):
    """Fused kernel.

    Ref layout (all whole-array, VMEM):
      ids_ref : (T*N, 1) int32  -- flattened token ids, row k = t*N + n
      emb_ref : (V, E)   f32    -- embedding table
      per layer l: w_ih (in_l, 4H), w_hh (H, 4H), b (1, 4H)   [gate order i, f, o, g]
      fcw_ref : (N, H, C) f32   -- fcw[n, h, c] = W_fc[c, n*H + h]
      fcb_ref : (1, C)   f32
      out_ref : (T, C)   f32    -- softmax probabilities
    """
    def kernel(*refs):
        ids_ref, emb_ref = refs[0], refs[1]
        w_refs = refs[2:2 + 3 * num_layers]
        fcw_ref = refs[2 + 3 * num_layers]
        fcb_ref = refs[3 + 3 * num_layers]
        out_ref = refs[4 + 3 * num_layers]

        V = emb_ref.shape[0]

        # ---- Embedding gather as a one-hot MXU matmul (no dynamic indexing). ----
        ids = ids_ref[...]                                                  # (T*N, 1) int32
        vocab_iota = jax.lax.broadcasted_iota(jnp.int32, (T * N, V), 1)
        onehot = (vocab_iota == ids).astype(jnp.float32)                    # (T*N, V)
        layer_in = jnp.dot(onehot, emb_ref[...],
                           preferred_element_type=jnp.float32)              # (T*N, E)

        # ---- Stacked LSTM (time/layer loops fully unrolled; T and L are tiny). ----
        last_outs = None
        for l in range(num_layers):
            w_ih = w_refs[3 * l][...]       # (in_l, 4H)
            w_hh = w_refs[3 * l + 1][...]   # (H, 4H)
            b = w_refs[3 * l + 2][...]      # (1, 4H)

            # Hoisted input projection: one matmul covers all timesteps of this layer.
            gin = jnp.dot(layer_in, w_ih,
                          preferred_element_type=jnp.float32) + b           # (T*N, 4H)

            h = jnp.zeros((N, H), jnp.float32)
            c = jnp.zeros((N, H), jnp.float32)
            outs = []
            for t in range(T):
                gates = gin[t * N:(t + 1) * N, :] + jnp.dot(
                    h, w_hh, preferred_element_type=jnp.float32)            # (N, 4H)
                # Gate order [i, f, o, g]: one wide sigmoid + one tanh.
                sig = jax.nn.sigmoid(gates[:, :3 * H])
                g_g = jnp.tanh(gates[:, 3 * H:])
                i_g = sig[:, 0 * H:1 * H]
                f_g = sig[:, 1 * H:2 * H]
                o_g = sig[:, 2 * H:3 * H]
                c = f_g * c + i_g * g_g
                h = o_g * jnp.tanh(c)
                outs.append(h)

            if l < num_layers - 1:
                layer_in = jnp.concatenate(outs, axis=0)                    # (T*N, H)
            else:
                last_outs = outs                                            # T values of (N, H)

        # ---- FC + softmax epilogue (stays in vregs; single store). ----
        # logits[t, c] = sum_n sum_h last_outs[t][n, h] * W_fc[c, n*H + h] + b_fc[c]
        acc = None
        for n in range(N):
            h_n = jnp.concatenate([last_outs[t][n:n + 1, :] for t in range(T)],
                                  axis=0)                                   # (T, H)
            contrib = jnp.dot(h_n, fcw_ref[n],
                              preferred_element_type=jnp.float32)           # (T, C)
            acc = contrib if acc is None else acc + contrib
        logits = acc + fcb_ref[...]                                         # (T, C)

        m = jnp.max(logits, axis=1, keepdims=True)
        e = jnp.exp(logits - m)
        s = jnp.sum(e, axis=1, keepdims=True)
        r = pl.reciprocal(s, approx=True)
        r = r * (2.0 - s * r)   # one Newton step: f32-level accuracy, still off the divide path
        out_ref[...] = e * r

    return kernel


# ----------------------------------------------------------------------------
# Wrapper
# ----------------------------------------------------------------------------
def model_forward(input_ids, params, config):
    B = config["batch_size"]      # "time" axis inside the kernel
    S = config["seq_length"]      # independent LSTM rows
    H = config["hidden_size"]
    C = config["num_classes"]
    L = config["num_layers"]

    ids2d = input_ids.reshape(B * S, 1).astype(jnp.int32)
    flat_w = [w for trip in params["lstm"] for w in trip]

    vmem = pl.BlockSpec(memory_space=pltpu.MemorySpace.VMEM)
    n_inputs = 2 + 3 * L + 2

    return pl.pallas_call(
        make_fused_kernel(L, B, S, H),
        out_shape=jax.ShapeDtypeStruct((B, C), jnp.float32),
        in_specs=[vmem] * n_inputs,
        out_specs=vmem,
    )(ids2d, params["embed"], *flat_w, params["fc_w3"], params["fc_b"])


def _reorder_gate_rows(w):
    """PyTorch fused-gate order [i, f, g, o] -> kernel order [i, f, o, g] along axis 0."""
    H = w.shape[0] // 4
    return jnp.concatenate([w[:2 * H], w[3 * H:], w[2 * H:3 * H]], axis=0)


def init_params(config, key):
    E = config["embedding_size"]
    H = config["hidden_size"]
    S = config["seq_length"]
    V = config["vocab_size"]
    C = config["num_classes"]
    L = config["num_layers"]

    keys = iter(jax.random.split(key, 1 + 4 * L + 2))
    params = {}

    # nn.Embedding default init ~ N(0, 1)
    params["embed"] = jax.random.normal(next(keys), (V, E), dtype=jnp.float32)

    # LSTM weights, PyTorch layout (4H, in)/(4H, H)/(4H,), uniform(-1/sqrt(H), 1/sqrt(H))
    k = 1.0 / math.sqrt(H)
    lstm = []
    for l in range(L):
        in_dim = E if l == 0 else H
        w_ih = jax.random.uniform(next(keys), (4 * H, in_dim), jnp.float32, -k, k)
        w_hh = jax.random.uniform(next(keys), (4 * H, H), jnp.float32, -k, k)
        b_ih = jax.random.uniform(next(keys), (4 * H,), jnp.float32, -k, k)
        b_hh = jax.random.uniform(next(keys), (4 * H,), jnp.float32, -k, k)
        # Kernel-friendly layout: gate-reordered [i,f,o,g], transposed, combined bias (1, 4H).
        w_ih_k = _reorder_gate_rows(w_ih).T
        w_hh_k = _reorder_gate_rows(w_hh).T
        b_k = _reorder_gate_rows(b_ih + b_hh).reshape(1, 4 * H)
        lstm.append((w_ih_k, w_hh_k, b_k))
    params["lstm"] = lstm

    # Linear(S*H, C), uniform(-1/sqrt(S*H), 1/sqrt(S*H))
    kf = 1.0 / math.sqrt(S * H)
    fc_w = jax.random.uniform(next(keys), (C, S * H), jnp.float32, -kf, kf)
    fc_b = jax.random.uniform(next(keys), (C,), jnp.float32, -kf, kf)
    # fc_w3[n, h, c] = fc_w[c, n*H + h]  (avoids any in-kernel cross-lane reshape)
    params["fc_w3"] = fc_w.reshape(C, S, H).transpose(1, 2, 0)
    params["fc_b"] = fc_b.reshape(1, C)
    return params


if __name__ == "__main__":
    config = {
        "seq_length": 8,
        "hidden_size": 32,
        "num_layers": 2,
        "batch_size": 2,
        "embedding_size": 16,
        "vocab_size": 50,
        "num_classes": 4,
    }

    key = jax.random.PRNGKey(0)
    pkey, ikey = jax.random.split(key)
    params = init_params(config, pkey)

    input_ids = jax.random.randint(
        ikey, (config["batch_size"], config["seq_length"]), 0, config["vocab_size"],
        dtype=jnp.int32,
    )

    out = model_forward(input_ids, params, config)
    out = jax.block_until_ready(out)

    assert out.shape == (config["batch_size"], config["num_classes"])
    assert bool(jnp.all(jnp.isfinite(out)))
    # softmax rows should sum to ~1 (approx reciprocal + 1 Newton step keeps f32-level accuracy)
    assert bool(jnp.allclose(jnp.sum(out, axis=1), 1.0, atol=1e-4))

    print("KERNEL_OK")
</pallas_src>

<mosaic_0001>
module attributes {stable_mosaic.version = 11 : i64} {
  func.func @kernel(%arg0: memref<16x1xi32, #tpu.memory_space<vmem>>, %arg1: memref<50x16xf32, #tpu.memory_space<vmem>>, %arg2: memref<16x128xf32, #tpu.memory_space<vmem>>, %arg3: memref<32x128xf32, #tpu.memory_space<vmem>>, %arg4: memref<1x128xf32, #tpu.memory_space<vmem>>, %arg5: memref<32x128xf32, #tpu.memory_space<vmem>>, %arg6: memref<32x128xf32, #tpu.memory_space<vmem>>, %arg7: memref<1x128xf32, #tpu.memory_space<vmem>>, %arg8: memref<8x32x4xf32, #tpu.memory_space<vmem>>, %arg9: memref<1x4xf32, #tpu.memory_space<vmem>>, %arg10: memref<2x4xf32, #tpu.memory_space<vmem>>) attributes {dimension_semantics = [], scalar_prefetch = 0 : i64, scratch_operands = 0 : i64, tpu.core_type = #tpu.core_type<tc>} {
    %c0 = arith.constant 0 : index
    %c0_0 = arith.constant 0 : index
    %0 = vector.load %arg0[%c0, %c0_0] : memref<16x1xi32, #tpu.memory_space<vmem>>, vector<16x1xi32>
    %1 = tpu.iota {dimensions = array<i32: 1>} : vector<16x50xi32>
    %2 = vector.broadcast %0 : vector<16x1xi32> to vector<16x50xi32>
    %3 = arith.cmpi eq, %1, %2 : vector<16x50xi32>
    %4 = arith.extui %3 : vector<16x50xi1> to vector<16x50xi32>
    %5 = arith.sitofp %4 : vector<16x50xi32> to vector<16x50xf32>
    %c0_1 = arith.constant 0 : index
    %c0_2 = arith.constant 0 : index
    %6 = vector.load %arg1[%c0_1, %c0_2] : memref<50x16xf32, #tpu.memory_space<vmem>>, vector<50x16xf32>
    %cst = arith.constant dense<0.000000e+00> : vector<16x16xf32>
    %7 = tpu.matmul %5, %6, %cst {dimension_numbers = #tpu.dot_dimension_numbers<[1], [0], [0], [1], [0, 0, 1, 1], [], []>} : vector<16x50xf32>, vector<50x16xf32>, vector<16x16xf32> -> vector<16x16xf32>
    %c0_3 = arith.constant 0 : index
    %c0_4 = arith.constant 0 : index
    %8 = vector.load %arg2[%c0_3, %c0_4] : memref<16x128xf32, #tpu.memory_space<vmem>>, vector<16x128xf32>
    %c0_5 = arith.constant 0 : index
    %c0_6 = arith.constant 0 : index
    %9 = vector.load %arg3[%c0_5, %c0_6] : memref<32x128xf32, #tpu.memory_space<vmem>>, vector<32x128xf32>
    %c0_7 = arith.constant 0 : index
    %c0_8 = arith.constant 0 : index
    %10 = vector.load %arg4[%c0_7, %c0_8] : memref<1x128xf32, #tpu.memory_space<vmem>>, vector<1x128xf32>
    %cst_9 = arith.constant dense<0.000000e+00> : vector<16x128xf32>
    %11 = tpu.matmul %7, %8, %cst_9 {dimension_numbers = #tpu.dot_dimension_numbers<[1], [0], [0], [1], [0, 0, 1, 1], [], []>} : vector<16x16xf32>, vector<16x128xf32>, vector<16x128xf32> -> vector<16x128xf32>
    %12 = vector.broadcast %10 : vector<1x128xf32> to vector<16x128xf32>
    %13 = arith.addf %11, %12 : vector<16x128xf32>
    %cst_10 = arith.constant 0.000000e+00 : f32
    %14 = vector.broadcast %cst_10 : f32 to vector<8x32xf32>
    %cst_11 = arith.constant 0.000000e+00 : f32
    %15 = vector.broadcast %cst_11 : f32 to vector<8x32xf32>
    %16 = vector.extract_strided_slice %13 {offsets = [0, 0], sizes = [8, 128], strides = [1, 1]} : vector<16x128xf32> to vector<8x128xf32>
    %cst_12 = arith.constant dense<0.000000e+00> : vector<8x128xf32>
    %17 = tpu.matmul %14, %9, %cst_12 {dimension_numbers = #tpu.dot_dimension_numbers<[1], [0], [0], [1], [0, 0, 1, 1], [], []>} : vector<8x32xf32>, vector<32x128xf32>, vector<8x128xf32> -> vector<8x128xf32>
    %18 = arith.addf %16, %17 : vector<8x128xf32>
    %19 = vector.extract_strided_slice %18 {offsets = [0, 0], sizes = [8, 96], strides = [1, 1]} : vector<8x128xf32> to vector<8x96xf32>
    %20 = arith.negf %19 : vector<8x96xf32>
    %21 = math.exp %20 : vector<8x96xf32>
    %cst_13 = arith.constant 1.000000e+00 : f32
    %22 = vector.broadcast %cst_13 : f32 to vector<8x96xf32>
    %23 = arith.addf %22, %21 : vector<8x96xf32>
    %24 = arith.divf %22, %23 : vector<8x96xf32>
    %25 = vector.extract_strided_slice %18 {offsets = [0, 96], sizes = [8, 32], strides = [1, 1]} : vector<8x128xf32> to vector<8x32xf32>
    %26 = math.tanh %25 : vector<8x32xf32>
    %27 = vector.extract_strided_slice %24 {offsets = [0, 0], sizes = [8, 32], strides = [1, 1]} : vector<8x96xf32> to vector<8x32xf32>
    %28 = vector.extract_strided_slice %24 {offsets = [0, 32], sizes = [8, 32], strides = [1, 1]} : vector<8x96xf32> to vector<8x32xf32>
    %29 = vector.extract_strided_slice %24 {offsets = [0, 64], sizes = [8, 32], strides = [1, 1]} : vector<8x96xf32> to vector<8x32xf32>
    %30 = arith.mulf %28, %15 : vector<8x32xf32>
    %31 = arith.mulf %27, %26 : vector<8x32xf32>
    %32 = arith.addf %30, %31 : vector<8x32xf32>
    %33 = math.tanh %32 : vector<8x32xf32>
    %34 = arith.mulf %29, %33 : vector<8x32xf32>
    %35 = vector.extract_strided_slice %13 {offsets = [8, 0], sizes = [8, 128], strides = [1, 1]} : vector<16x128xf32> to vector<8x128xf32>
    %cst_14 = arith.constant dense<0.000000e+00> : vector<8x128xf32>
    %36 = tpu.matmul %34, %9, %cst_14 {dimension_numbers = #tpu.dot_dimension_numbers<[1], [0], [0], [1], [0, 0, 1, 1], [], []>} : vector<8x32xf32>, vector<32x128xf32>, vector<8x128xf32> -> vector<8x128xf32>
    %37 = arith.addf %35, %36 : vector<8x128xf32>
    %38 = vector.extract_strided_slice %37 {offsets = [0, 0], sizes = [8, 96], strides = [1, 1]} : vector<8x128xf32> to vector<8x96xf32>
    %39 = arith.negf %38 : vector<8x96xf32>
    %40 = math.exp %39 : vector<8x96xf32>
    %cst_15 = arith.constant 1.000000e+00 : f32
    %41 = vector.broadcast %cst_15 : f32 to vector<8x96xf32>
    %42 = arith.addf %41, %40 : vector<8x96xf32>
    %43 = arith.divf %41, %42 : vector<8x96xf32>
    %44 = vector.extract_strided_slice %37 {offsets = [0, 96], sizes = [8, 32], strides = [1, 1]} : vector<8x128xf32> to vector<8x32xf32>
    %45 = math.tanh %44 : vector<8x32xf32>
    %46 = vector.extract_strided_slice %43 {offsets = [0, 0], sizes = [8, 32], strides = [1, 1]} : vector<8x96xf32> to vector<8x32xf32>
    %47 = vector.extract_strided_slice %43 {offsets = [0, 32], sizes = [8, 32], strides = [1, 1]} : vector<8x96xf32> to vector<8x32xf32>
    %48 = vector.extract_strided_slice %43 {offsets = [0, 64], sizes = [8, 32], strides = [1, 1]} : vector<8x96xf32> to vector<8x32xf32>
    %49 = arith.mulf %47, %32 : vector<8x32xf32>
    %50 = arith.mulf %46, %45 : vector<8x32xf32>
    %51 = arith.addf %49, %50 : vector<8x32xf32>
    %52 = math.tanh %51 : vector<8x32xf32>
    %53 = arith.mulf %48, %52 : vector<8x32xf32>
    %54 = tpu.concatenate %34, %53 in 0 : vector<8x32xf32>, vector<8x32xf32> -> vector<16x32xf32>
    %c0_16 = arith.constant 0 : index
    %c0_17 = arith.constant 0 : index
    %55 = vector.load %arg5[%c0_16, %c0_17] : memref<32x128xf32, #tpu.memory_space<vmem>>, vector<32x128xf32>
    %c0_18 = arith.constant 0 : index
    %c0_19 = arith.constant 0 : index
    %56 = vector.load %arg6[%c0_18, %c0_19] : memref<32x128xf32, #tpu.memory_space<vmem>>, vector<32x128xf32>
    %c0_20 = arith.constant 0 : index
    %c0_21 = arith.constant 0 : index
    %57 = vector.load %arg7[%c0_20, %c0_21] : memref<1x128xf32, #tpu.memory_space<vmem>>, vector<1x128xf32>
    %cst_22 = arith.constant dense<0.000000e+00> : vector<16x128xf32>
    %58 = tpu.matmul %54, %55, %cst_22 {dimension_numbers = #tpu.dot_dimension_numbers<[1], [0], [0], [1], [0, 0, 1, 1], [], []>} : vector<16x32xf32>, vector<32x128xf32>, vector<16x128xf32> -> vector<16x128xf32>
    %59 = vector.broadcast %57 : vector<1x128xf32> to vector<16x128xf32>
    %60 = arith.addf %58, %59 : vector<16x128xf32>
    %cst_23 = arith.constant 0.000000e+00 : f32
    %61 = vector.broadcast %cst_23 : f32 to vector<8x32xf32>
    %cst_24 = arith.constant 0.000000e+00 : f32
    %62 = vector.broadcast %cst_24 : f32 to vector<8x32xf32>
    %63 = vector.extract_strided_slice %60 {offsets = [0, 0], sizes = [8, 128], strides = [1, 1]} : vector<16x128xf32> to vector<8x128xf32>
    %cst_25 = arith.constant dense<0.000000e+00> : vector<8x128xf32>
    %64 = tpu.matmul %61, %56, %cst_25 {dimension_numbers = #tpu.dot_dimension_numbers<[1], [0], [0], [1], [0, 0, 1, 1], [], []>} : vector<8x32xf32>, vector<32x128xf32>, vector<8x128xf32> -> vector<8x128xf32>
    %65 = arith.addf %63, %64 : vector<8x128xf32>
    %66 = vector.extract_strided_slice %65 {offsets = [0, 0], sizes = [8, 96], strides = [1, 1]} : vector<8x128xf32> to vector<8x96xf32>
    %67 = arith.negf %66 : vector<8x96xf32>
    %68 = math.exp %67 : vector<8x96xf32>
    %cst_26 = arith.constant 1.000000e+00 : f32
    %69 = vector.broadcast %cst_26 : f32 to vector<8x96xf32>
    %70 = arith.addf %69, %68 : vector<8x96xf32>
    %71 = arith.divf %69, %70 : vector<8x96xf32>
    %72 = vector.extract_strided_slice %65 {offsets = [0, 96], sizes = [8, 32], strides = [1, 1]} : vector<8x128xf32> to vector<8x32xf32>
    %73 = math.tanh %72 : vector<8x32xf32>
    %74 = vector.extract_strided_slice %71 {offsets = [0, 0], sizes = [8, 32], strides = [1, 1]} : vector<8x96xf32> to vector<8x32xf32>
    %75 = vector.extract_strided_slice %71 {offsets = [0, 32], sizes = [8, 32], strides = [1, 1]} : vector<8x96xf32> to vector<8x32xf32>
    %76 = vector.extract_strided_slice %71 {offsets = [0, 64], sizes = [8, 32], strides = [1, 1]} : vector<8x96xf32> to vector<8x32xf32>
    %77 = arith.mulf %75, %62 : vector<8x32xf32>
    %78 = arith.mulf %74, %73 : vector<8x32xf32>
    %79 = arith.addf %77, %78 : vector<8x32xf32>
    %80 = math.tanh %79 : vector<8x32xf32>
    %81 = arith.mulf %76, %80 : vector<8x32xf32>
    %82 = vector.extract_strided_slice %60 {offsets = [8, 0], sizes = [8, 128], strides = [1, 1]} : vector<16x128xf32> to vector<8x128xf32>
    %cst_27 = arith.constant dense<0.000000e+00> : vector<8x128xf32>
    %83 = tpu.matmul %81, %56, %cst_27 {dimension_numbers = #tpu.dot_dimension_numbers<[1], [0], [0], [1], [0, 0, 1, 1], [], []>} : vector<8x32xf32>, vector<32x128xf32>, vector<8x128xf32> -> vector<8x128xf32>
    %84 = arith.addf %82, %83 : vector<8x128xf32>
    %85 = vector.extract_strided_slice %84 {offsets = [0, 0], sizes = [8, 96], strides = [1, 1]} : vector<8x128xf32> to vector<8x96xf32>
    %86 = arith.negf %85 : vector<8x96xf32>
    %87 = math.exp %86 : vector<8x96xf32>
    %cst_28 = arith.constant 1.000000e+00 : f32
    %88 = vector.broadcast %cst_28 : f32 to vector<8x96xf32>
    %89 = arith.addf %88, %87 : vector<8x96xf32>
    %90 = arith.divf %88, %89 : vector<8x96xf32>
    %91 = vector.extract_strided_slice %84 {offsets = [0, 96], sizes = [8, 32], strides = [1, 1]} : vector<8x128xf32> to vector<8x32xf32>
    %92 = math.tanh %91 : vector<8x32xf32>
    %93 = vector.extract_strided_slice %90 {offsets = [0, 0], sizes = [8, 32], strides = [1, 1]} : vector<8x96xf32> to vector<8x32xf32>
    %94 = vector.extract_strided_slice %90 {offsets = [0, 32], sizes = [8, 32], strides = [1, 1]} : vector<8x96xf32> to vector<8x32xf32>
    %95 = vector.extract_strided_slice %90 {offsets = [0, 64], sizes = [8, 32], strides = [1, 1]} : vector<8x96xf32> to vector<8x32xf32>
    %96 = arith.mulf %94, %79 : vector<8x32xf32>
    %97 = arith.mulf %93, %92 : vector<8x32xf32>
    %98 = arith.addf %96, %97 : vector<8x32xf32>
    %99 = math.tanh %98 : vector<8x32xf32>
    %100 = arith.mulf %95, %99 : vector<8x32xf32>
    %101 = vector.extract_strided_slice %81 {offsets = [0, 0], sizes = [1, 32], strides = [1, 1]} : vector<8x32xf32> to vector<1x32xf32>
    %102 = vector.extract_strided_slice %100 {offsets = [0, 0], sizes = [1, 32], strides = [1, 1]} : vector<8x32xf32> to vector<1x32xf32>
    %103 = tpu.concatenate %101, %102 in 0 : vector<1x32xf32>, vector<1x32xf32> -> vector<2x32xf32>
    %c0_29 = arith.constant 0 : index
    %c0_30 = arith.constant 0 : index
    %c0_31 = arith.constant 0 : index
    %104 = vector.load %arg8[%c0_29, %c0_30, %c0_31] : memref<8x32x4xf32, #tpu.memory_space<vmem>>, vector<1x32x4xf32>
    %105 = vector.shape_cast %104 : vector<1x32x4xf32> to vector<32x4xf32>
    %cst_32 = arith.constant dense<0.000000e+00> : vector<2x4xf32>
    %106 = tpu.matmul %103, %105, %cst_32 {dimension_numbers = #tpu.dot_dimension_numbers<[1], [0], [0], [1], [0, 0, 1, 1], [], []>} : vector<2x32xf32>, vector<32x4xf32>, vector<2x4xf32> -> vector<2x4xf32>
    %107 = vector.extract_strided_slice %81 {offsets = [1, 0], sizes = [1, 32], strides = [1, 1]} : vector<8x32xf32> to vector<1x32xf32>
    %108 = vector.extract_strided_slice %100 {offsets = [1, 0], sizes = [1, 32], strides = [1, 1]} : vector<8x32xf32> to vector<1x32xf32>
    %109 = tpu.concatenate %107, %108 in 0 : vector<1x32xf32>, vector<1x32xf32> -> vector<2x32xf32>
    %c1 = arith.constant 1 : index
    %c0_33 = arith.constant 0 : index
    %c0_34 = arith.constant 0 : index
    %110 = vector.load %arg8[%c1, %c0_33, %c0_34] : memref<8x32x4xf32, #tpu.memory_space<vmem>>, vector<1x32x4xf32>
    %111 = vector.shape_cast %110 : vector<1x32x4xf32> to vector<32x4xf32>
    %cst_35 = arith.constant dense<0.000000e+00> : vector<2x4xf32>
    %112 = tpu.matmul %109, %111, %cst_35 {dimension_numbers = #tpu.dot_dimension_numbers<[1], [0], [0], [1], [0, 0, 1, 1], [], []>} : vector<2x32xf32>, vector<32x4xf32>, vector<2x4xf32> -> vector<2x4xf32>
    %113 = arith.addf %106, %112 : vector<2x4xf32>
    %114 = vector.extract_strided_slice %81 {offsets = [2, 0], sizes = [1, 32], strides = [1, 1]} : vector<8x32xf32> to vector<1x32xf32>
    %115 = vector.extract_strided_slice %100 {offsets = [2, 0], sizes = [1, 32], strides = [1, 1]} : vector<8x32xf32> to vector<1x32xf32>
    %116 = tpu.concatenate %114, %115 in 0 : vector<1x32xf32>, vector<1x32xf32> -> vector<2x32xf32>
    %c2 = arith.constant 2 : index
    %c0_36 = arith.constant 0 : index
    %c0_37 = arith.constant 0 : index
    %117 = vector.load %arg8[%c2, %c0_36, %c0_37] : memref<8x32x4xf32, #tpu.memory_space<vmem>>, vector<1x32x4xf32>
    %118 = vector.shape_cast %117 : vector<1x32x4xf32> to vector<32x4xf32>
    %cst_38 = arith.constant dense<0.000000e+00> : vector<2x4xf32>
    %119 = tpu.matmul %116, %118, %cst_38 {dimension_numbers = #tpu.dot_dimension_numbers<[1], [0], [0], [1], [0, 0, 1, 1], [], []>} : vector<2x32xf32>, vector<32x4xf32>, vector<2x4xf32> -> vector<2x4xf32>
    %120 = arith.addf %113, %119 : vector<2x4xf32>
    %121 = vector.extract_strided_slice %81 {offsets = [3, 0], sizes = [1, 32], strides = [1, 1]} : vector<8x32xf32> to vector<1x32xf32>
    %122 = vector.extract_strided_slice %100 {offsets = [3, 0], sizes = [1, 32], strides = [1, 1]} : vector<8x32xf32> to vector<1x32xf32>
    %123 = tpu.concatenate %121, %122 in 0 : vector<1x32xf32>, vector<1x32xf32> -> vector<2x32xf32>
    %c3 = arith.constant 3 : index
    %c0_39 = arith.constant 0 : index
    %c0_40 = arith.constant 0 : index
    %124 = vector.load %arg8[%c3, %c0_39, %c0_40] : memref<8x32x4xf32, #tpu.memory_space<vmem>>, vector<1x32x4xf32>
    %125 = vector.shape_cast %124 : vector<1x32x4xf32> to vector<32x4xf32>
    %cst_41 = arith.constant dense<0.000000e+00> : vector<2x4xf32>
    %126 = tpu.matmul %123, %125, %cst_41 {dimension_numbers = #tpu.dot_dimension_numbers<[1], [0], [0], [1], [0, 0, 1, 1], [], []>} : vector<2x32xf32>, vector<32x4xf32>, vector<2x4xf32> -> vector<2x4xf32>
    %127 = arith.addf %120, %126 : vector<2x4xf32>
    %128 = vector.extract_strided_slice %81 {offsets = [4, 0], sizes = [1, 32], strides = [1, 1]} : vector<8x32xf32> to vector<1x32xf32>
    %129 = vector.extract_strided_slice %100 {offsets = [4, 0], sizes = [1, 32], strides = [1, 1]} : vector<8x32xf32> to vector<1x32xf32>
    %130 = tpu.concatenate %128, %129 in 0 : vector<1x32xf32>, vector<1x32xf32> -> vector<2x32xf32>
    %c4 = arith.constant 4 : index
    %c0_42 = arith.constant 0 : index
    %c0_43 = arith.constant 0 : index
    %131 = vector.load %arg8[%c4, %c0_42, %c0_43] : memref<8x32x4xf32, #tpu.memory_space<vmem>>, vector<1x32x4xf32>
    %132 = vector.shape_cast %131 : vector<1x32x4xf32> to vector<32x4xf32>
    %cst_44 = arith.constant dense<0.000000e+00> : vector<2x4xf32>
    %133 = tpu.matmul %130, %132, %cst_44 {dimension_numbers = #tpu.dot_dimension_numbers<[1], [0], [0], [1], [0, 0, 1, 1], [], []>} : vector<2x32xf32>, vector<32x4xf32>, vector<2x4xf32> -> vector<2x4xf32>
    %134 = arith.addf %127, %133 : vector<2x4xf32>
    %135 = vector.extract_strided_slice %81 {offsets = [5, 0], sizes = [1, 32], strides = [1, 1]} : vector<8x32xf32> to vector<1x32xf32>
    %136 = vector.extract_strided_slice %100 {offsets = [5, 0], sizes = [1, 32], strides = [1, 1]} : vector<8x32xf32> to vector<1x32xf32>
    %137 = tpu.concatenate %135, %136 in 0 : vector<1x32xf32>, vector<1x32xf32> -> vector<2x32xf32>
    %c5 = arith.constant 5 : index
    %c0_45 = arith.constant 0 : index
    %c0_46 = arith.constant 0 : index
    %138 = vector.load %arg8[%c5, %c0_45, %c0_46] : memref<8x32x4xf32, #tpu.memory_space<vmem>>, vector<1x32x4xf32>
    %139 = vector.shape_cast %138 : vector<1x32x4xf32> to vector<32x4xf32>
    %cst_47 = arith.constant dense<0.000000e+00> : vector<2x4xf32>
    %140 = tpu.matmul %137, %139, %cst_47 {dimension_numbers = #tpu.dot_dimension_numbers<[1], [0], [0], [1], [0, 0, 1, 1], [], []>} : vector<2x32xf32>, vector<32x4xf32>, vector<2x4xf32> -> vector<2x4xf32>
    %141 = arith.addf %134, %140 : vector<2x4xf32>
    %142 = vector.extract_strided_slice %81 {offsets = [6, 0], sizes = [1, 32], strides = [1, 1]} : vector<8x32xf32> to vector<1x32xf32>
    %143 = vector.extract_strided_slice %100 {offsets = [6, 0], sizes = [1, 32], strides = [1, 1]} : vector<8x32xf32> to vector<1x32xf32>
    %144 = tpu.concatenate %142, %143 in 0 : vector<1x32xf32>, vector<1x32xf32> -> vector<2x32xf32>
    %c6 = arith.constant 6 : index
    %c0_48 = arith.constant 0 : index
    %c0_49 = arith.constant 0 : index
    %145 = vector.load %arg8[%c6, %c0_48, %c0_49] : memref<8x32x4xf32, #tpu.memory_space<vmem>>, vector<1x32x4xf32>
    %146 = vector.shape_cast %145 : vector<1x32x4xf32> to vector<32x4xf32>
    %cst_50 = arith.constant dense<0.000000e+00> : vector<2x4xf32>
    %147 = tpu.matmul %144, %146, %cst_50 {dimension_numbers = #tpu.dot_dimension_numbers<[1], [0], [0], [1], [0, 0, 1, 1], [], []>} : vector<2x32xf32>, vector<32x4xf32>, vector<2x4xf32> -> vector<2x4xf32>
    %148 = arith.addf %141, %147 : vector<2x4xf32>
    %149 = vector.extract_strided_slice %81 {offsets = [7, 0], sizes = [1, 32], strides = [1, 1]} : vector<8x32xf32> to vector<1x32xf32>
    %150 = vector.extract_strided_slice %100 {offsets = [7, 0], sizes = [1, 32], strides = [1, 1]} : vector<8x32xf32> to vector<1x32xf32>
    %151 = tpu.concatenate %149, %150 in 0 : vector<1x32xf32>, vector<1x32xf32> -> vector<2x32xf32>
    %c7 = arith.constant 7 : index
    %c0_51 = arith.constant 0 : index
    %c0_52 = arith.constant 0 : index
    %152 = vector.load %arg8[%c7, %c0_51, %c0_52] : memref<8x32x4xf32, #tpu.memory_space<vmem>>, vector<1x32x4xf32>
    %153 = vector.shape_cast %152 : vector<1x32x4xf32> to vector<32x4xf32>
    %cst_53 = arith.constant dense<0.000000e+00> : vector<2x4xf32>
    %154 = tpu.matmul %151, %153, %cst_53 {dimension_numbers = #tpu.dot_dimension_numbers<[1], [0], [0], [1], [0, 0, 1, 1], [], []>} : vector<2x32xf32>, vector<32x4xf32>, vector<2x4xf32> -> vector<2x4xf32>
    %155 = arith.addf %148, %154 : vector<2x4xf32>
    %c0_54 = arith.constant 0 : index
    %c0_55 = arith.constant 0 : index
    %156 = vector.load %arg9[%c0_54, %c0_55] : memref<1x4xf32, #tpu.memory_space<vmem>>, vector<1x4xf32>
    %157 = vector.broadcast %156 : vector<1x4xf32> to vector<2x4xf32>
    %158 = arith.addf %155, %157 : vector<2x4xf32>
    %cst_56 = arith.constant dense<0xFF800000> : vector<2xf32>
    %159 = vector.multi_reduction <maximumf>, %158, %cst_56 [1] : vector<2x4xf32> to vector<2xf32>
    %160 = vector.shape_cast %159 : vector<2xf32> to vector<2x1xf32>
    %161 = vector.broadcast %160 : vector<2x1xf32> to vector<2x4xf32>
    %162 = arith.subf %158, %161 : vector<2x4xf32>
    %163 = math.exp %162 : vector<2x4xf32>
    %cst_57 = arith.constant dense<0.000000e+00> : vector<2xf32>
    %164 = vector.multi_reduction <add>, %163, %cst_57 [1] : vector<2x4xf32> to vector<2xf32>
    %165 = vector.shape_cast %164 : vector<2xf32> to vector<2x1xf32>
    %166 = tpu.reciprocal %165 {approx = true} : vector<2x1xf32> -> vector<2x1xf32>
    %167 = arith.mulf %165, %166 : vector<2x1xf32>
    %cst_58 = arith.constant 2.000000e+00 : f32
    %168 = vector.broadcast %cst_58 : f32 to vector<2x1xf32>
    %169 = arith.subf %168, %167 : vector<2x1xf32>
    %170 = arith.mulf %166, %169 : vector<2x1xf32>
    %171 = vector.broadcast %170 : vector<2x1xf32> to vector<2x4xf32>
    %172 = arith.mulf %163, %171 : vector<2x4xf32>
    %c0_59 = arith.constant 0 : index
    %c0_60 = arith.constant 0 : index
    %173 = vector.load %arg10[%c0_59, %c0_60] : memref<2x4xf32, #tpu.memory_space<vmem>>, vector<2x4xf32>
    tpu.vector_store %arg10[%c0_59, %c0_60], %172 {strides = array<i32>} : memref<2x4xf32, #tpu.memory_space<vmem>>, vector<2x4xf32>,
    return
  }
}

</mosaic_0001>

<llo_original>
// kernel: tpu_custom_call.1
$region0: #{tpu_custom_call.1}
  #allocation0 [shape = 'u32[]', space=smem, size = 0x4, offset = 0x4, fixed_abs, tag = 'smem constant byte address 0x4 - core index']
  #allocation1 [shape = 'u32[72,128]{1,0:T(1,128)}', space=vmem, size = 0x9000, scoped, tag = 'internal scratch']
  %s0 = inlined_call_operand.vmem [shape: s32[16,1], index: 0, kind: input, shape index: {}]
  %s1 = inlined_call_operand.vmem [shape: f32[50,16], index: 1, kind: input, shape index: {}]
  %s2 = inlined_call_operand.vmem [shape: f32[16,128], index: 2, kind: input, shape index: {}]
  %s3 = inlined_call_operand.vmem [shape: f32[32,128], index: 3, kind: input, shape index: {}]
  %s4 = inlined_call_operand.vmem [shape: f32[1,128], index: 4, kind: input, shape index: {}]
  %s5 = inlined_call_operand.vmem [shape: f32[32,128], index: 5, kind: input, shape index: {}]
  %s6 = inlined_call_operand.vmem [shape: f32[32,128], index: 6, kind: input, shape index: {}]
  %s7 = inlined_call_operand.vmem [shape: f32[1,128], index: 7, kind: input, shape index: {}]
  %s8 = inlined_call_operand.vmem [shape: f32[8,32,4], index: 8, kind: input, shape index: {}]
  %s9 = inlined_call_operand.vmem [shape: f32[1,4], index: 9, kind: input, shape index: {}]
  %s10 = inlined_call_operand.hbm [shape: f32[2,4], index: 10, kind: output, shape index: {}]
  %s11 = sld [smem:[#allocation0]]
  $region50: #{tpu_custom_call.1} parent=0
    _
  %s13 = ssub.s32 1, %s11
  %s14 = scalar_select 0, %s13, %s11
  $region1: #{tpu_custom_call.1} parent=0
    #allocation2 [shape = 'u8[1024]{0}', space=vmem, size = 0x400, scoped, tag = 'output window, operand 0, single buffered']
    #allocation3 [shape = 's32[1]{0}', space=sflag, size = 0x4, scoped, tag = 'scoped memory for tpu_custom_call.1']
    %15 = vsyncpa [#allocation3], 0
    // Predicated region
    $region2: #{tpu_custom_call.1} parent=1 // pred_check
      _
    $region3: #{tpu_custom_call.1} parent=1 // pred_check_branch
      %17 = sbr.rel (0) target = $region5
    $region4: #{tpu_custom_call.1} parent=1 // pred_region
      _
    $region5: #{tpu_custom_call.1} parent=1 // pred_fallthru
      _
    // Predicated region
    $region6: #{tpu_custom_call.1} parent=1 // pred_check
      _
    $region7: #{tpu_custom_call.1} parent=1 // pred_check_branch
      %19 = sbr.rel (0) target = $region9
    $region8: #{tpu_custom_call.1} parent=1 // pred_region
      _
    $region9: #{tpu_custom_call.1} parent=1 // pred_fallthru
      _
    // Predicated region
    $region10: #{tpu_custom_call.1} parent=1 // pred_check
      _
    $region11: #{tpu_custom_call.1} parent=1 // pred_check_branch
      %21 = sbr.rel (0) target = $region13
    $region12: #{tpu_custom_call.1} parent=1 // pred_region
      _
    $region13: #{tpu_custom_call.1} parent=1 // pred_fallthru
      _
    // Predicated region
    $region14: #{tpu_custom_call.1} parent=1 // pred_check
      _
    $region15: #{tpu_custom_call.1} parent=1 // pred_check_branch
      %23 = sbr.rel (0) target = $region17
    $region16: #{tpu_custom_call.1} parent=1 // pred_region
      _
    $region17: #{tpu_custom_call.1} parent=1 // pred_fallthru
      _
    // Predicated region
    $region18: #{tpu_custom_call.1} parent=1 // pred_check
      _
    $region19: #{tpu_custom_call.1} parent=1 // pred_check_branch
      %25 = sbr.rel (0) target = $region21
    $region20: #{tpu_custom_call.1} parent=1 // pred_region
      _
    $region21: #{tpu_custom_call.1} parent=1 // pred_fallthru
      _
    // Predicated region
    $region22: #{tpu_custom_call.1} parent=1 // pred_check
      _
    $region23: #{tpu_custom_call.1} parent=1 // pred_check_branch
      %27 = sbr.rel (0) target = $region25
    $region24: #{tpu_custom_call.1} parent=1 // pred_region
      _
    $region25: #{tpu_custom_call.1} parent=1 // pred_fallthru
      _
    // Predicated region
    $region26: #{tpu_custom_call.1} parent=1 // pred_check
      _
    $region27: #{tpu_custom_call.1} parent=1 // pred_check_branch
      %29 = sbr.rel (0) target = $region29
    $region28: #{tpu_custom_call.1} parent=1 // pred_region
      _
    $region29: #{tpu_custom_call.1} parent=1 // pred_fallthru
      _
    // Predicated region
    $region30: #{tpu_custom_call.1} parent=1 // pred_check
      _
    $region31: #{tpu_custom_call.1} parent=1 // pred_check_branch
      %31 = sbr.rel (0) target = $region33
    $region32: #{tpu_custom_call.1} parent=1 // pred_region
      _
    $region33: #{tpu_custom_call.1} parent=1 // pred_fallthru
      _
    // Predicated region
    $region34: #{tpu_custom_call.1} parent=1 // pred_check
      _
    $region35: #{tpu_custom_call.1} parent=1 // pred_check_branch
      %33 = sbr.rel (0) target = $region37
    $region36: #{tpu_custom_call.1} parent=1 // pred_region
      _
    $region37: #{tpu_custom_call.1} parent=1 // pred_fallthru
      _
    // Predicated region
    $region38: #{tpu_custom_call.1} parent=1 // pred_check
      _
    $region39: #{tpu_custom_call.1} parent=1 // pred_check_branch
      %35 = sbr.rel (0) target = $region41
    $region40: #{tpu_custom_call.1} parent=1 // pred_region
      _
    $region41: #{tpu_custom_call.1} parent=1 // pred_fallthru
      _
    %v36 = vld [vmem:[%s0] sm:$0xff]
    %v37 = vld [vmem:[%s0 + $0x8] sm:$0xff]
    %v38 = vlaneseq
    %v39 = vand.u32 %v38, 127
    %40 = vset.pattern.permute.xlu0 0
    %41 = vperm.xlu0 %40, %v36
    %v42 = vpop.permute.xlu0 %41
    %43 = vset.pattern.permute.xlu0 0
    %44 = vperm.xlu0 %43, %v37
    %v45 = vpop.permute.xlu0 %44
    %vm46 = vcmp.eq.s32.totalorder %v39, %v42
    %vm47 = vcmp.eq.s32.totalorder %v39, %v45
    %v48 = vsel %vm46, 1, 0
    %v49 = vsel %vm47, 1, 0
    %v50 = vcvt.s32.f32 %v48
    %v51 = vcvt.s32.f32 %v49
    %v52 = vld [vmem:[%s1] sm:$0xff]
    %v53 = vld [vmem:[%s1 + $0x8] sm:$0xff]
    %v54 = vld [vmem:[%s1 + $0x10] sm:$0xff]
    %v55 = vld [vmem:[%s1 + $0x18] sm:$0xff]
    %v56 = vld [vmem:[%s1 + $0x20] sm:$0xff]
    %v57 = vld [vmem:[%s1 + $0x28] sm:$0xff]
    %v58 = vld [vmem:[%s1 + $0x30] sm:$0x3]
    %vm59 = vcmask 408576
    %v61 = vsel %vm59, %v50, 0
    %v64 = vsel %vm59, %v51, 0
    %vm66 = vcmask 1041408
    %v68 = vsel %vm66, %v58, 0
    %70 = vmatpush.msra.mxu0 0.0
    %71 = vmatpush.msra.mxu0 0.0
    %72 = vmatpush.msra.mxu0 0.0
    %73 = vmatpush.msra.mxu0 0.0
    %74 = vmatpush.msra.mxu0 0.0
    %75 = vmatpush.msra.mxu0 0.0
    %76 = vmatpush.msra.mxu0 0.0
    %77 = vmatpush.msra.mxu0 0.0
    %78 = vmatpush.msra.mxu0 0.0
    %79 = vmatpush.msra.mxu0 %v68
    %80 = vmatpush.msra.mxu0 %v57
    %81 = vmatpush.msra.mxu0 %v56
    %82 = vmatpush.msra.mxu0 %v55
    %83 = vmatpush.msra.mxu0 %v54
    %84 = vmatpush.msra.mxu0 %v53
    %85 = vmatpush.msra.mxu0 %v52
    %86 = vmatmul.f32.gmra.mxu0 %v61
    %v87 = vpop.f32.mrf.mxu0
    %v88 = vadd.f32 0.0, %v87
    %89 = vmatmul.f32.gmra.mxu0 %v64
    %v90 = vpop.f32.mrf.mxu0
    %v91 = vadd.f32 0.0, %v90
    %92 = vdwg.mxu0
    %v93 = vld [vmem:[%s2] sm:$0xff]
    %v94 = vld [vmem:[%s2 + $0x8] sm:$0xff]
    %v95 = vld [vmem:[%s3] sm:$0xff]
    %v96 = vld [vmem:[%s3 + $0x8] sm:$0xff]
    %v97 = vld [vmem:[%s3 + $0x10] sm:$0xff]
    %v98 = vld [vmem:[%s3 + $0x18] sm:$0xff]
    %v99 = vld [vmem:[%s4] sm:$0x1]
    %v101 = vperm.slane %v99, 0
    %vm103 = vcmask 130048
    %v105 = vsel %vm103, %v88, 0
    %v108 = vsel %vm103, %v91, 0
    %110 = vmatpush.msra.mxu0 0.0
    %111 = vmatpush.msra.mxu0 0.0
    %112 = vmatpush.msra.mxu0 0.0
    %113 = vmatpush.msra.mxu0 0.0
    %114 = vmatpush.msra.mxu0 0.0
    %115 = vmatpush.msra.mxu0 0.0
    %116 = vmatpush.msra.mxu0 0.0
    %117 = vmatpush.msra.mxu0 0.0
    %118 = vmatpush.msra.mxu0 0.0
    %119 = vmatpush.msra.mxu0 0.0
    %120 = vmatpush.msra.mxu0 0.0
    %121 = vmatpush.msra.mxu0 0.0
    %122 = vmatpush.msra.mxu0 0.0
    %123 = vmatpush.msra.mxu0 0.0
    %124 = vmatpush.msra.mxu0 %v94
    %125 = vmatpush.msra.mxu0 %v93
    %126 = vmatmul.f32.gmra.mxu0 %v105
    %v127 = vpop.f32.mrf.mxu0
    %v128 = vadd.f32 %v101, %v127
    %129 = vmatmul.f32.gmra.mxu0 %v108
    %v130 = vpop.f32.mrf.mxu0
    %v131 = vadd.f32 %v101, %v130
    %132 = vdwg.mxu0
    %vm133 = vcmask 261120
    %v135 = vsel %vm133, 0.0, 0
    %137 = vmatpush.msra.mxu0 0.0
    %138 = vmatpush.msra.mxu0 0.0
    %139 = vmatpush.msra.mxu0 0.0
    %140 = vmatpush.msra.mxu0 0.0
    %141 = vmatpush.msra.mxu0 0.0
    %142 = vmatpush.msra.mxu0 0.0
    %143 = vmatpush.msra.mxu0 0.0
    %144 = vmatpush.msra.mxu0 0.0
    %145 = vmatpush.msra.mxu0 0.0
    %146 = vmatpush.msra.mxu0 0.0
    %147 = vmatpush.msra.mxu0 0.0
    %148 = vmatpush.msra.mxu0 0.0
    %149 = vmatpush.msra.mxu0 %v98
    %150 = vmatpush.msra.mxu0 %v97
    %151 = vmatpush.msra.mxu0 %v96
    %152 = vmatpush.msra.mxu0 %v95
    %153 = vmatmul.f32.gmra.mxu0 %v135
    %v154 = vpop.f32.mrf.mxu0
    %v155 = vadd.f32 0.0, %v154
    %156 = vdwg.mxu0
    %v157 = vadd.f32 %v128, %v155
    %v158 = vxor.u32 %v157, 2147483648
    %v159 = vmul.f32 %v158, 1.442695
    %v160 = vpow.pop %v159
    %v161 = vadd.f32 %v160, 1.0
    %v162 = vrcp.pop %v161
    %v163 = vmul.f32 %v161, %v162
    %v164 = vsub.f32 1.0, %v163
    %v165 = vmul.f32 %v162, %v164
    %v166 = vadd.f32 %v162, %v165
    %vm167 = vweird.f32 %v161
    %vm168 = vweird.f32 %v162
    %vm169 = vmor %vm167, %vm168
    %v170 = vsel %vm169, %v162, %v166
    %v171 = vand.u32 2147483647, %v161
    %vm172 = vcmp.eq.f32.partialorder %v171, 8.507059e+37
    %v173 = vand.u32 %v161, 2147483648
    %v174 = vor.u32 1.1754944e-38, %v173
    %v175 = vsel %vm172, %v174, %v170
    %v176 = vmul.f32 1.0, %v175
    %v177 = vtanh.pop %v157
    %v178 = vmul.f32 %v176, 0.0
    %180 = vrot.lane.b32.xlu0 %v177, 32
    %v181 = vpop.permute.xlu0 %180
    %v183 = vmul.f32 %v176, %v181
    %185 = vrot.lane.b32.xlu0 %v183, 32
    %v186 = vpop.permute.xlu0 %185
    %v188 = vadd.f32 %v178, %v186
    %v189 = vtanh.pop %v188
    %191 = vrot.lane.b32.xlu0 %v189, 32
    %v192 = vpop.permute.xlu0 %191
    %v194 = vmul.f32 %v176, %v192
    %196 = vrot.lane.b32.xlu0 %v194, 64
    %v197 = vpop.permute.xlu0 %196
    %v198 = vsel %vm133, %v197, 0
    %200 = vmatpush.msra.mxu0 0.0
    %201 = vmatpush.msra.mxu0 0.0
    %202 = vmatpush.msra.mxu0 0.0
    %203 = vmatpush.msra.mxu0 0.0
    %204 = vmatpush.msra.mxu0 0.0
    %205 = vmatpush.msra.mxu0 0.0
    %206 = vmatpush.msra.mxu0 0.0
    %207 = vmatpush.msra.mxu0 0.0
    %208 = vmatpush.msra.mxu0 0.0
    %209 = vmatpush.msra.mxu0 0.0
    %210 = vmatpush.msra.mxu0 0.0
    %211 = vmatpush.msra.mxu0 0.0
    %212 = vmatpush.msra.mxu0 %v98
    %213 = vmatpush.msra.mxu0 %v97
    %214 = vmatpush.msra.mxu0 %v96
    %215 = vmatpush.msra.mxu0 %v95
    %216 = vmatmul.f32.gmra.mxu0 %v198
    %v217 = vpop.f32.mrf.mxu0
    %v218 = vadd.f32 0.0, %v217
    %219 = vdwg.mxu0
    %v220 = vadd.f32 %v131, %v218
    %v221 = vxor.u32 %v220, 2147483648
    %v222 = vmul.f32 %v221, 1.442695
    %v223 = vpow.pop %v222
    %v224 = vadd.f32 %v223, 1.0
    %v225 = vrcp.pop %v224
    %v226 = vmul.f32 %v224, %v225
    %v227 = vsub.f32 1.0, %v226
    %v228 = vmul.f32 %v225, %v227
    %v229 = vadd.f32 %v225, %v228
    %vm230 = vweird.f32 %v224
    %vm231 = vweird.f32 %v225
    %vm232 = vmor %vm230, %vm231
    %v233 = vsel %vm232, %v225, %v229
    %v234 = vand.u32 2147483647, %v224
    %vm235 = vcmp.eq.f32.partialorder %v234, 8.507059e+37
    %v236 = vand.u32 %v224, 2147483648
    %v237 = vor.u32 1.1754944e-38, %v236
    %v238 = vsel %vm235, %v237, %v233
    %v239 = vmul.f32 1.0, %v238
    %v240 = vtanh.pop %v220
    %v241 = vmul.f32 %v239, %v188
    %243 = vrot.lane.b32.xlu0 %v240, 32
    %v244 = vpop.permute.xlu0 %243
    %v246 = vmul.f32 %v239, %v244
    %248 = vrot.lane.b32.xlu0 %v246, 32
    %v249 = vpop.permute.xlu0 %248
    %v251 = vadd.f32 %v241, %v249
    %v252 = vtanh.pop %v251
    %254 = vrot.lane.b32.xlu0 %v252, 32
    %v255 = vpop.permute.xlu0 %254
    %v257 = vmul.f32 %v239, %v255
    %v258 = vld [vmem:[%s5] sm:$0xff]
    %v259 = vld [vmem:[%s5 + $0x8] sm:$0xff]
    %v260 = vld [vmem:[%s5 + $0x10] sm:$0xff]
    %v261 = vld [vmem:[%s5 + $0x18] sm:$0xff]
    %v262 = vld [vmem:[%s6] sm:$0xff]
    %v263 = vld [vmem:[%s6 + $0x8] sm:$0xff]
    %v264 = vld [vmem:[%s6 + $0x10] sm:$0xff]
    %v265 = vld [vmem:[%s6 + $0x18] sm:$0xff]
    %v266 = vld [vmem:[%s7] sm:$0x1]
    %v268 = vperm.slane %v266, 0
    %271 = vrot.lane.b32.xlu0 %v257, 64
    %v272 = vpop.permute.xlu0 %271
    %v273 = vsel %vm133, %v272, 0
    %275 = vmatpush.msra.mxu0 0.0
    %276 = vmatpush.msra.mxu0 0.0
    %277 = vmatpush.msra.mxu0 0.0
    %278 = vmatpush.msra.mxu0 0.0
    %279 = vmatpush.msra.mxu0 0.0
    %280 = vmatpush.msra.mxu0 0.0
    %281 = vmatpush.msra.mxu0 0.0
    %282 = vmatpush.msra.mxu0 0.0
    %283 = vmatpush.msra.mxu0 0.0
    %284 = vmatpush.msra.mxu0 0.0
    %285 = vmatpush.msra.mxu0 0.0
    %286 = vmatpush.msra.mxu0 0.0
    %287 = vmatpush.msra.mxu0 %v261
    %288 = vmatpush.msra.mxu0 %v260
    %289 = vmatpush.msra.mxu0 %v259
    %290 = vmatpush.msra.mxu0 %v258
    %291 = vmatmul.f32.gmra.mxu0 %v198
    %v292 = vpop.f32.mrf.mxu0
    %v293 = vadd.f32 %v268, %v292
    %294 = vmatmul.f32.gmra.mxu0 %v273
    %v295 = vpop.f32.mrf.mxu0
    %v296 = vadd.f32 %v268, %v295
    %297 = vdwg.mxu0
    %298 = vmatpush.msra.mxu0 0.0
    %299 = vmatpush.msra.mxu0 0.0
    %300 = vmatpush.msra.mxu0 0.0
    %301 = vmatpush.msra.mxu0 0.0
    %302 = vmatpush.msra.mxu0 0.0
    %303 = vmatpush.msra.mxu0 0.0
    %304 = vmatpush.msra.mxu0 0.0
    %305 = vmatpush.msra.mxu0 0.0
    %306 = vmatpush.msra.mxu0 0.0
    %307 = vmatpush.msra.mxu0 0.0
    %308 = vmatpush.msra.mxu0 0.0
    %309 = vmatpush.msra.mxu0 0.0
    %310 = vmatpush.msra.mxu0 %v265
    %311 = vmatpush.msra.mxu0 %v264
    %312 = vmatpush.msra.mxu0 %v263
    %313 = vmatpush.msra.mxu0 %v262
    %314 = vmatmul.f32.gmra.mxu0 %v135
    %v315 = vpop.f32.mrf.mxu0
    %v316 = vadd.f32 0.0, %v315
    %317 = vdwg.mxu0
    %v318 = vadd.f32 %v293, %v316
    %v319 = vxor.u32 %v318, 2147483648
    %v320 = vmul.f32 %v319, 1.442695
    %v321 = vpow.pop %v320
    %v322 = vadd.f32 %v321, 1.0
    %v323 = vrcp.pop %v322
    %v324 = vmul.f32 %v322, %v323
    %v325 = vsub.f32 1.0, %v324
    %v326 = vmul.f32 %v323, %v325
    %v327 = vadd.f32 %v323, %v326
    %vm328 = vweird.f32 %v322
    %vm329 = vweird.f32 %v323
    %vm330 = vmor %vm328, %vm329
    %v331 = vsel %vm330, %v323, %v327
    %v332 = vand.u32 2147483647, %v322
    %vm333 = vcmp.eq.f32.partialorder %v332, 8.507059e+37
    %v334 = vand.u32 %v322, 2147483648
    %v335 = vor.u32 1.1754944e-38, %v334
    %v336 = vsel %vm333, %v335, %v331
    %v337 = vmul.f32 1.0, %v336
    %v338 = vtanh.pop %v318
    %v339 = vmul.f32 %v337, 0.0
    %341 = vrot.lane.b32.xlu0 %v338, 32
    %v342 = vpop.permute.xlu0 %341
    %v344 = vmul.f32 %v337, %v342
    %346 = vrot.lane.b32.xlu0 %v344, 32
    %v347 = vpop.permute.xlu0 %346
    %v349 = vadd.f32 %v339, %v347
    %v350 = vtanh.pop %v349
    %352 = vrot.lane.b32.xlu0 %v350, 32
    %v353 = vpop.permute.xlu0 %352
    %v355 = vmul.f32 %v337, %v353
    %357 = vrot.lane.b32.xlu0 %v355, 64
    %v358 = vpop.permute.xlu0 %357
    %v359 = vsel %vm133, %v358, 0
    %361 = vmatpush.msra.mxu0 0.0
    %362 = vmatpush.msra.mxu0 0.0
    %363 = vmatpush.msra.mxu0 0.0
    %364 = vmatpush.msra.mxu0 0.0
    %365 = vmatpush.msra.mxu0 0.0
    %366 = vmatpush.msra.mxu0 0.0
    %367 = vmatpush.msra.mxu0 0.0
    %368 = vmatpush.msra.mxu0 0.0
    %369 = vmatpush.msra.mxu0 0.0
    %370 = vmatpush.msra.mxu0 0.0
    %371 = vmatpush.msra.mxu0 0.0
    %372 = vmatpush.msra.mxu0 0.0
    %373 = vmatpush.msra.mxu0 %v265
    %374 = vmatpush.msra.mxu0 %v264
    %375 = vmatpush.msra.mxu0 %v263
    %376 = vmatpush.msra.mxu0 %v262
    %377 = vmatmul.f32.gmra.mxu0 %v359
    %v378 = vpop.f32.mrf.mxu0
    %v379 = vadd.f32 0.0, %v378
    %380 = vdwg.mxu0
    %v381 = vadd.f32 %v296, %v379
    %v382 = vxor.u32 %v381, 2147483648
    %v383 = vmul.f32 %v382, 1.442695
    %v384 = vpow.pop %v383
    %v385 = vadd.f32 %v384, 1.0
    %v386 = vrcp.pop %v385
    %v387 = vmul.f32 %v385, %v386
    %v388 = vsub.f32 1.0, %v387
    %v389 = vmul.f32 %v386, %v388
    %v390 = vadd.f32 %v386, %v389
    %vm391 = vweird.f32 %v385
    %vm392 = vweird.f32 %v386
    %vm393 = vmor %vm391, %vm392
    %v394 = vsel %vm393, %v386, %v390
    %v395 = vand.u32 2147483647, %v385
    %vm396 = vcmp.eq.f32.partialorder %v395, 8.507059e+37
    %v397 = vand.u32 %v385, 2147483648
    %v398 = vor.u32 1.1754944e-38, %v397
    %v399 = vsel %vm396, %v398, %v394
    %v400 = vmul.f32 1.0, %v399
    %v401 = vtanh.pop %v381
    %v402 = vmul.f32 %v400, %v349
    %404 = vrot.lane.b32.xlu0 %v401, 32
    %v405 = vpop.permute.xlu0 %404
    %v407 = vmul.f32 %v400, %v405
    %409 = vrot.lane.b32.xlu0 %v407, 32
    %v410 = vpop.permute.xlu0 %409
    %v412 = vadd.f32 %v402, %v410
    %v413 = vtanh.pop %v412
    %415 = vrot.lane.b32.xlu0 %v413, 32
    %v416 = vpop.permute.xlu0 %415
    %v418 = vmul.f32 %v400, %v416
    %v420 = vrot.slane %v418, 7
    %vm422 = vcmask 1040384
    %v423 = vsel %vm422, %v355, %v420
    %v424 = vld [vmem:[%s8] sm:$0xff]
    %v425 = vld [vmem:[%s8 + $0x8] sm:$0xff]
    %v426 = vld [vmem:[%s8 + $0x10] sm:$0xff]
    %v427 = vld [vmem:[%s8 + $0x18] sm:$0xff]
    %v428 = vrot.slane %v355, 1
    %v430 = vsel %vm422, %v428, %v418
    %s431 = scalar_lea.vmem %s8, 32
    %v432 = vld [vmem:[%s431] sm:$0xff]
    %v433 = vld [vmem:[%s431 + $0x8] sm:$0xff]
    %v434 = vld [vmem:[%s431 + $0x10] sm:$0xff]
    %v435 = vld [vmem:[%s431 + $0x18] sm:$0xff]
    %437 = vrot.lane.b32.xlu0 %v430, 64
    %v438 = vpop.permute.xlu0 %437
    %v439 = vsel %vm133, %v438, 0
    %441 = vmatpush.msra.mxu0 0.0
    %442 = vmatpush.msra.mxu0 0.0
    %443 = vmatpush.msra.mxu0 0.0
    %444 = vmatpush.msra.mxu0 0.0
    %445 = vmatpush.msra.mxu0 0.0
    %446 = vmatpush.msra.mxu0 0.0
    %447 = vmatpush.msra.mxu0 0.0
    %448 = vmatpush.msra.mxu0 0.0
    %449 = vmatpush.msra.mxu0 0.0
    %450 = vmatpush.msra.mxu0 0.0
    %451 = vmatpush.msra.mxu0 0.0
    %452 = vmatpush.msra.mxu0 0.0
    %453 = vmatpush.msra.mxu0 %v435
    %454 = vmatpush.msra.mxu0 %v434
    %455 = vmatpush.msra.mxu0 %v433
    %456 = vmatpush.msra.mxu0 %v432
    %457 = vmatmul.f32.gmra.mxu0 %v439
    %v458 = vpop.f32.mrf.mxu0
    %v459 = vadd.f32 0.0, %v458
    %460 = vdwg.mxu0
    %462 = vrot.lane.b32.xlu0 %v423, 64
    %v463 = vpop.permute.xlu0 %462
    %v464 = vsel %vm133, %v463, 0
    %466 = vmatpush.msra.mxu0 0.0
    %467 = vmatpush.msra.mxu0 0.0
    %468 = vmatpush.msra.mxu0 0.0
    %469 = vmatpush.msra.mxu0 0.0
    %470 = vmatpush.msra.mxu0 0.0
    %471 = vmatpush.msra.mxu0 0.0
    %472 = vmatpush.msra.mxu0 0.0
    %473 = vmatpush.msra.mxu0 0.0
    %474 = vmatpush.msra.mxu0 0.0
    %475 = vmatpush.msra.mxu0 0.0
    %476 = vmatpush.msra.mxu0 0.0
    %477 = vmatpush.msra.mxu0 0.0
    %478 = vmatpush.msra.mxu0 %v427
    %479 = vmatpush.msra.mxu0 %v426
    %480 = vmatpush.msra.mxu0 %v425
    %481 = vmatpush.msra.mxu0 %v424
    %482 = vmatmul.f32.gmra.mxu0 %v464
    %v483 = vpop.f32.mrf.mxu0
    %v484 = vadd.f32 %v459, %v483
    %485 = vdwg.mxu0
    %v486 = vrot.slane %v355, 2
    %v488 = vrot.slane %v418, 1
    %v490 = vsel %vm422, %v486, %v488
    %s491 = scalar_lea.vmem %s8, 64
    %v492 = vld [vmem:[%s491] sm:$0xff]
    %v493 = vld [vmem:[%s491 + $0x8] sm:$0xff]
    %v494 = vld [vmem:[%s491 + $0x10] sm:$0xff]
    %v495 = vld [vmem:[%s491 + $0x18] sm:$0xff]
    %497 = vrot.lane.b32.xlu0 %v490, 64
    %v498 = vpop.permute.xlu0 %497
    %v499 = vsel %vm133, %v498, 0
    %501 = vmatpush.msra.mxu0 0.0
    %502 = vmatpush.msra.mxu0 0.0
    %503 = vmatpush.msra.mxu0 0.0
    %504 = vmatpush.msra.mxu0 0.0
    %505 = vmatpush.msra.mxu0 0.0
    %506 = vmatpush.msra.mxu0 0.0
    %507 = vmatpush.msra.mxu0 0.0
    %508 = vmatpush.msra.mxu0 0.0
    %509 = vmatpush.msra.mxu0 0.0
    %510 = vmatpush.msra.mxu0 0.0
    %511 = vmatpush.msra.mxu0 0.0
    %512 = vmatpush.msra.mxu0 0.0
    %513 = vmatpush.msra.mxu0 %v495
    %514 = vmatpush.msra.mxu0 %v494
    %515 = vmatpush.msra.mxu0 %v493
    %516 = vmatpush.msra.mxu0 %v492
    %517 = vmatmul.f32.gmra.mxu0 %v499
    %v518 = vpop.f32.mrf.mxu0
    %v519 = vadd.f32 0.0, %v518
    %520 = vdwg.mxu0
    %v521 = vadd.f32 %v484, %v519
    %v522 = vrot.slane %v355, 3
    %v524 = vrot.slane %v418, 2
    %v526 = vsel %vm422, %v522, %v524
    %s527 = scalar_lea.vmem %s8, 96
    %v528 = vld [vmem:[%s527] sm:$0xff]
    %v529 = vld [vmem:[%s527 + $0x8] sm:$0xff]
    %v530 = vld [vmem:[%s527 + $0x10] sm:$0xff]
    %v531 = vld [vmem:[%s527 + $0x18] sm:$0xff]
    %533 = vrot.lane.b32.xlu0 %v526, 64
    %v534 = vpop.permute.xlu0 %533
    %v535 = vsel %vm133, %v534, 0
    %537 = vmatpush.msra.mxu0 0.0
    %538 = vmatpush.msra.mxu0 0.0
    %539 = vmatpush.msra.mxu0 0.0
    %540 = vmatpush.msra.mxu0 0.0
    %541 = vmatpush.msra.mxu0 0.0
    %542 = vmatpush.msra.mxu0 0.0
    %543 = vmatpush.msra.mxu0 0.0
    %544 = vmatpush.msra.mxu0 0.0
    %545 = vmatpush.msra.mxu0 0.0
    %546 = vmatpush.msra.mxu0 0.0
    %547 = vmatpush.msra.mxu0 0.0
    %548 = vmatpush.msra.mxu0 0.0
    %549 = vmatpush.msra.mxu0 %v531
    %550 = vmatpush.msra.mxu0 %v530
    %551 = vmatpush.msra.mxu0 %v529
    %552 = vmatpush.msra.mxu0 %v528
    %553 = vmatmul.f32.gmra.mxu0 %v535
    %v554 = vpop.f32.mrf.mxu0
    %v555 = vadd.f32 0.0, %v554
    %556 = vdwg.mxu0
    %v557 = vadd.f32 %v521, %v555
    %v558 = vrot.slane %v355, 4
    %v560 = vrot.slane %v418, 3
    %v562 = vsel %vm422, %v558, %v560
    %s563 = scalar_lea.vmem %s8, 128
    %v564 = vld [vmem:[%s563] sm:$0xff]
    %v565 = vld [vmem:[%s563 + $0x8] sm:$0xff]
    %v566 = vld [vmem:[%s563 + $0x10] sm:$0xff]
    %v567 = vld [vmem:[%s563 + $0x18] sm:$0xff]
    %569 = vrot.lane.b32.xlu0 %v562, 64
    %v570 = vpop.permute.xlu0 %569
    %v571 = vsel %vm133, %v570, 0
    %573 = vmatpush.msra.mxu0 0.0
    %574 = vmatpush.msra.mxu0 0.0
    %575 = vmatpush.msra.mxu0 0.0
    %576 = vmatpush.msra.mxu0 0.0
    %577 = vmatpush.msra.mxu0 0.0
    %578 = vmatpush.msra.mxu0 0.0
    %579 = vmatpush.msra.mxu0 0.0
    %580 = vmatpush.msra.mxu0 0.0
    %581 = vmatpush.msra.mxu0 0.0
    %582 = vmatpush.msra.mxu0 0.0
    %583 = vmatpush.msra.mxu0 0.0
    %584 = vmatpush.msra.mxu0 0.0
    %585 = vmatpush.msra.mxu0 %v567
    %586 = vmatpush.msra.mxu0 %v566
    %587 = vmatpush.msra.mxu0 %v565
    %588 = vmatpush.msra.mxu0 %v564
    %589 = vmatmul.f32.gmra.mxu0 %v571
    %v590 = vpop.f32.mrf.mxu0
    %v591 = vadd.f32 0.0, %v590
    %592 = vdwg.mxu0
    %v593 = vadd.f32 %v557, %v591
    %v594 = vrot.slane %v355, 5
    %v596 = vrot.slane %v418, 4
    %v598 = vsel %vm422, %v594, %v596
    %s599 = scalar_lea.vmem %s8, 160
    %v600 = vld [vmem:[%s599] sm:$0xff]
    %v601 = vld [vmem:[%s599 + $0x8] sm:$0xff]
    %v602 = vld [vmem:[%s599 + $0x10] sm:$0xff]
    %v603 = vld [vmem:[%s599 + $0x18] sm:$0xff]
    %605 = vrot.lane.b32.xlu0 %v598, 64
    %v606 = vpop.permute.xlu0 %605
    %v607 = vsel %vm133, %v606, 0
    %609 = vmatpush.msra.mxu0 0.0
    %610 = vmatpush.msra.mxu0 0.0
    %611 = vmatpush.msra.mxu0 0.0
    %612 = vmatpush.msra.mxu0 0.0
    %613 = vmatpush.msra.mxu0 0.0
    %614 = vmatpush.msra.mxu0 0.0
    %615 = vmatpush.msra.mxu0 0.0
    %616 = vmatpush.msra.mxu0 0.0
    %617 = vmatpush.msra.mxu0 0.0
    %618 = vmatpush.msra.mxu0 0.0
    %619 = vmatpush.msra.mxu0 0.0
    %620 = vmatpush.msra.mxu0 0.0
    %621 = vmatpush.msra.mxu0 %v603
    %622 = vmatpush.msra.mxu0 %v602
    %623 = vmatpush.msra.mxu0 %v601
    %624 = vmatpush.msra.mxu0 %v600
    %625 = vmatmul.f32.gmra.mxu0 %v607
    %v626 = vpop.f32.mrf.mxu0
    %v627 = vadd.f32 0.0, %v626
    %628 = vdwg.mxu0
    %v629 = vadd.f32 %v593, %v627
    %v630 = vrot.slane %v355, 6
    %v632 = vrot.slane %v418, 5
    %v634 = vsel %vm422, %v630, %v632
    %s635 = scalar_lea.vmem %s8, 192
    %v636 = vld [vmem:[%s635] sm:$0xff]
    %v637 = vld [vmem:[%s635 + $0x8] sm:$0xff]
    %v638 = vld [vmem:[%s635 + $0x10] sm:$0xff]
    %v639 = vld [vmem:[%s635 + $0x18] sm:$0xff]
    %641 = vrot.lane.b32.xlu0 %v634, 64
    %v642 = vpop.permute.xlu0 %641
    %v643 = vsel %vm133, %v642, 0
    %645 = vmatpush.msra.mxu0 0.0
    %646 = vmatpush.msra.mxu0 0.0
    %647 = vmatpush.msra.mxu0 0.0
    %648 = vmatpush.msra.mxu0 0.0
    %649 = vmatpush.msra.mxu0 0.0
    %650 = vmatpush.msra.mxu0 0.0
    %651 = vmatpush.msra.mxu0 0.0
    %652 = vmatpush.msra.mxu0 0.0
    %653 = vmatpush.msra.mxu0 0.0
    %654 = vmatpush.msra.mxu0 0.0
    %655 = vmatpush.msra.mxu0 0.0
    %656 = vmatpush.msra.mxu0 0.0
    %657 = vmatpush.msra.mxu0 %v639
    %658 = vmatpush.msra.mxu0 %v638
    %659 = vmatpush.msra.mxu0 %v637
    %660 = vmatpush.msra.mxu0 %v636
    %661 = vmatmul.f32.gmra.mxu0 %v643
    %v662 = vpop.f32.mrf.mxu0
    %v663 = vadd.f32 0.0, %v662
    %664 = vdwg.mxu0
    %v665 = vadd.f32 %v629, %v663
    %v666 = vrot.slane %v355, 7
    %v668 = vrot.slane %v418, 6
    %v670 = vsel %vm422, %v666, %v668
    %s671 = scalar_lea.vmem %s8, 224
    %v672 = vld [vmem:[%s671] sm:$0xff]
    %v673 = vld [vmem:[%s671 + $0x8] sm:$0xff]
    %v674 = vld [vmem:[%s671 + $0x10] sm:$0xff]
    %v675 = vld [vmem:[%s671 + $0x18] sm:$0xff]
    %677 = vrot.lane.b32.xlu0 %v670, 64
    %v678 = vpop.permute.xlu0 %677
    %v679 = vsel %vm133, %v678, 0
    %681 = vmatpush.msra.mxu0 0.0
    %682 = vmatpush.msra.mxu0 0.0
    %683 = vmatpush.msra.mxu0 0.0
    %684 = vmatpush.msra.mxu0 0.0
    %685 = vmatpush.msra.mxu0 0.0
    %686 = vmatpush.msra.mxu0 0.0
    %687 = vmatpush.msra.mxu0 0.0
    %688 = vmatpush.msra.mxu0 0.0
    %689 = vmatpush.msra.mxu0 0.0
    %690 = vmatpush.msra.mxu0 0.0
    %691 = vmatpush.msra.mxu0 0.0
    %692 = vmatpush.msra.mxu0 0.0
    %693 = vmatpush.msra.mxu0 %v675
    %694 = vmatpush.msra.mxu0 %v674
    %695 = vmatpush.msra.mxu0 %v673
    %696 = vmatpush.msra.mxu0 %v672
    %697 = vmatmul.f32.gmra.mxu0 %v679
    %v698 = vpop.f32.mrf.mxu0
    %v699 = vadd.f32 0.0, %v698
    %700 = vdwg.mxu0
    %v701 = vadd.f32 %v665, %v699
    %v702 = vld [vmem:[%s9] sm:$0x1]
    %v704 = vperm.slane %v702, 0
    %v706 = vadd.f32 %v701, %v704
    %vm707 = vcmask 25600
    %v708 = vsel %vm707, %v706, -inf
    %709 = vmax.xlane.f32.xlu0 %v708
    %v710 = vpop.xlane.xlu0 %709
    %v711 = vsub.f32 %v706, %v710
    %v712 = vmul.f32 %v711, 1.442695
    %v713 = vpow.pop %v712
    %v714 = vsel %vm707, %v713, 0.0
    %715 = vadd.xlane.f32.xlu0 %v714
    %v716 = vpop.xlane.xlu0 %715
    %v717 = vrcp.pop %v716
    %v718 = vmul.f32 %v716, %v717
    %v719 = vsub.f32 2.0, %v718
    %v720 = vmul.f32 %v717, %v719
    %v721 = vmul.f32 %v713, %v720
    %722 = vst.msk [vmem:[#allocation2] sm:$0x3] %vm707, %v721
    // Predicated region
    $region42: #{tpu_custom_call.1} parent=1 // pred_check
      _
    $region43: #{tpu_custom_call.1} parent=1 // pred_check_branch
      %724 = sbr.rel (0) target = $region45
    $region44: #{tpu_custom_call.1} parent=1 // pred_region
      %726 = vsyncadd [#allocation3], 0
      %s728 = sshll.u32 [#allocation2], 4
      %s729 = int_to_ptr.vmem [resolvable:$true] %s728
      %s730 = sshll.u32 %s10, 4
      %s731 = int_to_ptr.hbm [resolvable:$true] %s730
      %733 = dma.vmem_to_hbm [thread:$0]  %s729, 32, %s731, [#allocation3]
    $region45: #{tpu_custom_call.1} parent=1 // pred_fallthru
      _
    // Predicated region
    $region46: #{tpu_custom_call.1} parent=1 // pred_check
      _
    $region47: #{tpu_custom_call.1} parent=1 // pred_check_branch
      %735 = sbr.rel (0) target = $region49
    $region48: #{tpu_custom_call.1} parent=1 // pred_region
      %737 = dma.done [#allocation3], 32
    $region49: #{tpu_custom_call.1} parent=1 // pred_fallthru
      _
    %738 = vsyncpa [#allocation3], 1

</llo_original>
